<compile_context>
chip_gen: v7x
topology: tpu7x:2x2x1
jax: 0.10.0
libtpu: 0.0.40
codegen_flags: <defaults>
</compile_context>

<pallas_src>
import math
import functools

import jax
import jax.numpy as jnp
from jax.experimental import pallas as pl
from jax.experimental.pallas import tpu as pltpu


# ----------------------------------------------------------------------------- helpers
def _round_up(x, m):
    return ((x + m - 1) // m) * m


def _choose_tm(batch):
    if batch >= 256:
        return 256          # fill the 256-row MXU on v6e / v7x
    if batch >= 128:
        return 128          # fill the 128-row MXU on v5e
    return _round_up(max(batch, 1), 8)   # tiny batches: one full-array tile


def _pad2(a, rows, cols):
    return jnp.pad(a, ((0, rows - a.shape[0]), (0, cols - a.shape[1])))


# ----------------------------------------------------------------------------- kernel
def _ae_kernel(x_ref,
               w1_ref, b1_ref, w2_ref, b2_ref, w3_ref, b3_ref,
               w4_ref, b4_ref, w5_ref, b5_ref, w6_ref, b6_ref,
               y_ref):
    """One batch tile: full fused 6-layer MLP. Inputs/weights bf16, acc f32."""

    def layer(h_bf16, w_ref, b_ref, relu):
        acc = jnp.dot(h_bf16, w_ref[...], preferred_element_type=jnp.float32)
        acc = acc + b_ref[...]          # bias kept in f32
        if relu:
            acc = jnp.maximum(acc, 0.0)
        return acc

    h = x_ref[...]                                              # bf16 (TM, io_p)
    # ----- encoder -----
    h = layer(h, w1_ref, b1_ref, True).astype(jnp.bfloat16)
    h = layer(h, w2_ref, b2_ref, True).astype(jnp.bfloat16)
    z = layer(h, w3_ref, b3_ref, False).astype(jnp.bfloat16)    # bottleneck, no act
    # ----- decoder -----
    h = layer(z, w4_ref, b4_ref, True).astype(jnp.bfloat16)
    h = layer(h, w5_ref, b5_ref, True).astype(jnp.bfloat16)
    y = layer(h, w6_ref, b6_ref, False)                         # final, no act (f32)

    y_ref[...] = y.astype(y_ref.dtype)


# ----------------------------------------------------------------------------- wrapper
@functools.partial(jax.jit, static_argnames=())
def mixed_variable_dae_forward(x, params):
    """x: [batch, io_size] f32; params: list of 6 (W[in,out] f32, b[1,out] f32)."""
    batch, io = x.shape
    z = params[2][0].shape[1]

    io_p = _round_up(io, 128)
    z_p = _round_up(z, 128)
    tm = _choose_tm(batch)
    batch_p = _round_up(batch, tm)
    grid = (batch_p // tm,)

    # Zero-pad feature dims to lane multiples (exact) and cast weights to bf16.
    padded_dims = [(io_p, io_p), (io_p, io_p), (io_p, z_p),
                   (z_p, io_p), (io_p, io_p), (io_p, io_p)]
    pw, pb = [], []
    for (w, b), (fi, fo) in zip(params, padded_dims):
        pw.append(_pad2(w, fi, fo).astype(jnp.bfloat16))
        pb.append(_pad2(b, 1, fo).astype(jnp.float32))

    # Pad batch / features of the activations; bf16 at the MXU input.
    x_p = _pad2(x, batch_p, io_p).astype(jnp.bfloat16)

    # Tile over the batch; weights/biases are VMEM-resident (same block every step).
    x_spec = pl.BlockSpec((tm, io_p), lambda i: (i, 0))
    out_spec = pl.BlockSpec((tm, io_p), lambda i: (i, 0))
    in_specs = [x_spec]
    args = [x_p]
    for w, b in zip(pw, pb):
        in_specs.append(pl.BlockSpec(w.shape, lambda i: (0, 0)))
        in_specs.append(pl.BlockSpec(b.shape, lambda i: (0, 0)))
        args += [w, b]

    # VMEM budget: resident weights/biases + double-buffered x (bf16) / y (f32) tiles.
    weight_bytes = sum(int(w.size) * 2 + int(b.size) * 4 for w, b in zip(pw, pb))
    tile_bytes = 2 * tm * io_p * 2 + 2 * tm * io_p * 4
    need_bytes = int(1.5 * (weight_bytes + tile_bytes))
    ck = dict(dimension_semantics=("parallel",))     # v7x: both TCs split the batch
    if need_bytes > 32 * 1024 * 1024:
        ck["vmem_limit_bytes"] = min(need_bytes, 100 * 1024 * 1024)

    y_p = pl.pallas_call(
        _ae_kernel,
        out_shape=jax.ShapeDtypeStruct((batch_p, io_p), jnp.float32),
        grid=grid,
        in_specs=in_specs,
        out_specs=out_spec,
        compiler_params=pltpu.CompilerParams(**ck),
    )(*args)

    return y_p[:batch, :io]


# ----------------------------------------------------------------------------- init / reference
def xavier_uniform(key, fan_in, fan_out):
    bound = math.sqrt(6.0 / (fan_in + fan_out))
    return jax.random.uniform(key, (fan_in, fan_out), jnp.float32,
                              minval=-bound, maxval=bound)


def build_params(key, io_size, z_size):
    sizes = [(io_size, io_size), (io_size, io_size), (io_size, z_size),   # encoder
             (z_size, io_size), (io_size, io_size), (io_size, io_size)]   # decoder
    keys = jax.random.split(key, len(sizes))
    params = []
    for k, (fi, fo) in zip(keys, sizes):
        w = xavier_uniform(k, fi, fo)
        b = jnp.zeros((1, fo), jnp.float32)
        params.append((w, b))
    return params


def reference_forward(x, params):
    """Pure f32 reference of the PyTorch forward pass."""
    h = jnp.maximum(x @ params[0][0] + params[0][1], 0.0)
    h = jnp.maximum(h @ params[1][0] + params[1][1], 0.0)
    z = h @ params[2][0] + params[2][1]
    h = jnp.maximum(z @ params[3][0] + params[3][1], 0.0)
    h = jnp.maximum(h @ params[4][0] + params[4][1], 0.0)
    y = h @ params[5][0] + params[5][1]
    return y


# ----------------------------------------------------------------------------- main
if __name__ == "__main__":
    key = jax.random.PRNGKey(0)
    kx, kp = jax.random.split(key)

    batch, io_size, z_size = 8, 128, 32
    x = jax.random.normal(kx, (batch, io_size), jnp.float32)
    params = build_params(kp, io_size, z_size)

    y = mixed_variable_dae_forward(x, params)
    y = jax.block_until_ready(y)

    y_ref = reference_forward(x, params)
    assert y.shape == (batch, io_size)
    # bf16 matmul inputs with f32 accumulation -> ~1% relative error vs f32 ref.
    assert jnp.allclose(y, y_ref, atol=5e-2, rtol=5e-2), "mismatch vs f32 reference"

    print("KERNEL_OK")
</pallas_src>

<mosaic_0001>
module attributes {stable_mosaic.version = 11 : i64} {
  func.func @_ae_kernel(%arg0: i32, %arg1: memref<8x128xbf16, #tpu.memory_space<vmem>>, %arg2: memref<128x128xbf16, #tpu.memory_space<vmem>>, %arg3: memref<1x128xf32, #tpu.memory_space<vmem>>, %arg4: memref<128x128xbf16, #tpu.memory_space<vmem>>, %arg5: memref<1x128xf32, #tpu.memory_space<vmem>>, %arg6: memref<128x128xbf16, #tpu.memory_space<vmem>>, %arg7: memref<1x128xf32, #tpu.memory_space<vmem>>, %arg8: memref<128x128xbf16, #tpu.memory_space<vmem>>, %arg9: memref<1x128xf32, #tpu.memory_space<vmem>>, %arg10: memref<128x128xbf16, #tpu.memory_space<vmem>>, %arg11: memref<1x128xf32, #tpu.memory_space<vmem>>, %arg12: memref<128x128xbf16, #tpu.memory_space<vmem>>, %arg13: memref<1x128xf32, #tpu.memory_space<vmem>>, %arg14: memref<8x128xf32, #tpu.memory_space<vmem>>) attributes {dimension_semantics = [#tpu.dimension_semantics<parallel>], iteration_bounds = array<i64: 1>, scalar_prefetch = 0 : i64, scratch_operands = 0 : i64, tpu.core_type = #tpu.core_type<tc>, window_params = [{transform_indices = @transform_0, window_bounds = array<i64: 8, 128>}, {pipeline_mode = #tpu.pipeline_mode<synchronous>, transform_indices = @transform_1, window_bounds = array<i64: 128, 128>}, {pipeline_mode = #tpu.pipeline_mode<synchronous>, transform_indices = @transform_2, window_bounds = array<i64: 1, 128>}, {pipeline_mode = #tpu.pipeline_mode<synchronous>, transform_indices = @transform_3, window_bounds = array<i64: 128, 128>}, {pipeline_mode = #tpu.pipeline_mode<synchronous>, transform_indices = @transform_4, window_bounds = array<i64: 1, 128>}, {pipeline_mode = #tpu.pipeline_mode<synchronous>, transform_indices = @transform_5, window_bounds = array<i64: 128, 128>}, {pipeline_mode = #tpu.pipeline_mode<synchronous>, transform_indices = @transform_6, window_bounds = array<i64: 1, 128>}, {pipeline_mode = #tpu.pipeline_mode<synchronous>, transform_indices = @transform_7, window_bounds = array<i64: 128, 128>}, {pipeline_mode = #tpu.pipeline_mode<synchronous>, transform_indices = @transform_8, window_bounds = array<i64: 1, 128>}, {pipeline_mode = #tpu.pipeline_mode<synchronous>, transform_indices = @transform_9, window_bounds = array<i64: 128, 128>}, {pipeline_mode = #tpu.pipeline_mode<synchronous>, transform_indices = @transform_10, window_bounds = array<i64: 1, 128>}, {pipeline_mode = #tpu.pipeline_mode<synchronous>, transform_indices = @transform_11, window_bounds = array<i64: 128, 128>}, {pipeline_mode = #tpu.pipeline_mode<synchronous>, transform_indices = @transform_12, window_bounds = array<i64: 1, 128>}, {transform_indices = @transform_13, window_bounds = array<i64: 8, 128>}]} {
    %c0 = arith.constant 0 : index
    %c0_0 = arith.constant 0 : index
    %0 = vector.load %arg1[%c0, %c0_0] : memref<8x128xbf16, #tpu.memory_space<vmem>>, vector<8x128xbf16>
    %c0_1 = arith.constant 0 : index
    %c0_2 = arith.constant 0 : index
    %1 = vector.load %arg2[%c0_1, %c0_2] : memref<128x128xbf16, #tpu.memory_space<vmem>>, vector<128x128xbf16>
    %cst = arith.constant dense<0.000000e+00> : vector<8x128xf32>
    %2 = tpu.matmul %0, %1, %cst {dimension_numbers = #tpu.dot_dimension_numbers<[1], [0], [0], [1], [0, 0, 1, 1], [], []>} : vector<8x128xbf16>, vector<128x128xbf16>, vector<8x128xf32> -> vector<8x128xf32>
    %c0_3 = arith.constant 0 : index
    %c0_4 = arith.constant 0 : index
    %3 = vector.load %arg3[%c0_3, %c0_4] : memref<1x128xf32, #tpu.memory_space<vmem>>, vector<1x128xf32>
    %4 = vector.broadcast %3 : vector<1x128xf32> to vector<8x128xf32>
    %5 = arith.addf %2, %4 : vector<8x128xf32>
    %cst_5 = arith.constant 0.000000e+00 : f32
    %6 = vector.broadcast %cst_5 : f32 to vector<8x128xf32>
    %7 = arith.maximumf %5, %6 : vector<8x128xf32>
    %8 = arith.truncf %7 : vector<8x128xf32> to vector<8x128xbf16>
    %c0_6 = arith.constant 0 : index
    %c0_7 = arith.constant 0 : index
    %9 = vector.load %arg4[%c0_6, %c0_7] : memref<128x128xbf16, #tpu.memory_space<vmem>>, vector<128x128xbf16>
    %cst_8 = arith.constant dense<0.000000e+00> : vector<8x128xf32>
    %10 = tpu.matmul %8, %9, %cst_8 {dimension_numbers = #tpu.dot_dimension_numbers<[1], [0], [0], [1], [0, 0, 1, 1], [], []>} : vector<8x128xbf16>, vector<128x128xbf16>, vector<8x128xf32> -> vector<8x128xf32>
    %c0_9 = arith.constant 0 : index
    %c0_10 = arith.constant 0 : index
    %11 = vector.load %arg5[%c0_9, %c0_10] : memref<1x128xf32, #tpu.memory_space<vmem>>, vector<1x128xf32>
    %12 = vector.broadcast %11 : vector<1x128xf32> to vector<8x128xf32>
    %13 = arith.addf %10, %12 : vector<8x128xf32>
    %cst_11 = arith.constant 0.000000e+00 : f32
    %14 = vector.broadcast %cst_11 : f32 to vector<8x128xf32>
    %15 = arith.maximumf %13, %14 : vector<8x128xf32>
    %16 = arith.truncf %15 : vector<8x128xf32> to vector<8x128xbf16>
    %c0_12 = arith.constant 0 : index
    %c0_13 = arith.constant 0 : index
    %17 = vector.load %arg6[%c0_12, %c0_13] : memref<128x128xbf16, #tpu.memory_space<vmem>>, vector<128x128xbf16>
    %cst_14 = arith.constant dense<0.000000e+00> : vector<8x128xf32>
    %18 = tpu.matmul %16, %17, %cst_14 {dimension_numbers = #tpu.dot_dimension_numbers<[1], [0], [0], [1], [0, 0, 1, 1], [], []>} : vector<8x128xbf16>, vector<128x128xbf16>, vector<8x128xf32> -> vector<8x128xf32>
    %c0_15 = arith.constant 0 : index
    %c0_16 = arith.constant 0 : index
    %19 = vector.load %arg7[%c0_15, %c0_16] : memref<1x128xf32, #tpu.memory_space<vmem>>, vector<1x128xf32>
    %20 = vector.broadcast %19 : vector<1x128xf32> to vector<8x128xf32>
    %21 = arith.addf %18, %20 : vector<8x128xf32>
    %22 = arith.truncf %21 : vector<8x128xf32> to vector<8x128xbf16>
    %c0_17 = arith.constant 0 : index
    %c0_18 = arith.constant 0 : index
    %23 = vector.load %arg8[%c0_17, %c0_18] : memref<128x128xbf16, #tpu.memory_space<vmem>>, vector<128x128xbf16>
    %cst_19 = arith.constant dense<0.000000e+00> : vector<8x128xf32>
    %24 = tpu.matmul %22, %23, %cst_19 {dimension_numbers = #tpu.dot_dimension_numbers<[1], [0], [0], [1], [0, 0, 1, 1], [], []>} : vector<8x128xbf16>, vector<128x128xbf16>, vector<8x128xf32> -> vector<8x128xf32>
    %c0_20 = arith.constant 0 : index
    %c0_21 = arith.constant 0 : index
    %25 = vector.load %arg9[%c0_20, %c0_21] : memref<1x128xf32, #tpu.memory_space<vmem>>, vector<1x128xf32>
    %26 = vector.broadcast %25 : vector<1x128xf32> to vector<8x128xf32>
    %27 = arith.addf %24, %26 : vector<8x128xf32>
    %cst_22 = arith.constant 0.000000e+00 : f32
    %28 = vector.broadcast %cst_22 : f32 to vector<8x128xf32>
    %29 = arith.maximumf %27, %28 : vector<8x128xf32>
    %30 = arith.truncf %29 : vector<8x128xf32> to vector<8x128xbf16>
    %c0_23 = arith.constant 0 : index
    %c0_24 = arith.constant 0 : index
    %31 = vector.load %arg10[%c0_23, %c0_24] : memref<128x128xbf16, #tpu.memory_space<vmem>>, vector<128x128xbf16>
    %cst_25 = arith.constant dense<0.000000e+00> : vector<8x128xf32>
    %32 = tpu.matmul %30, %31, %cst_25 {dimension_numbers = #tpu.dot_dimension_numbers<[1], [0], [0], [1], [0, 0, 1, 1], [], []>} : vector<8x128xbf16>, vector<128x128xbf16>, vector<8x128xf32> -> vector<8x128xf32>
    %c0_26 = arith.constant 0 : index
    %c0_27 = arith.constant 0 : index
    %33 = vector.load %arg11[%c0_26, %c0_27] : memref<1x128xf32, #tpu.memory_space<vmem>>, vector<1x128xf32>
    %34 = vector.broadcast %33 : vector<1x128xf32> to vector<8x128xf32>
    %35 = arith.addf %32, %34 : vector<8x128xf32>
    %cst_28 = arith.constant 0.000000e+00 : f32
    %36 = vector.broadcast %cst_28 : f32 to vector<8x128xf32>
    %37 = arith.maximumf %35, %36 : vector<8x128xf32>
    %38 = arith.truncf %37 : vector<8x128xf32> to vector<8x128xbf16>
    %c0_29 = arith.constant 0 : index
    %c0_30 = arith.constant 0 : index
    %39 = vector.load %arg12[%c0_29, %c0_30] : memref<128x128xbf16, #tpu.memory_space<vmem>>, vector<128x128xbf16>
    %cst_31 = arith.constant dense<0.000000e+00> : vector<8x128xf32>
    %40 = tpu.matmul %38, %39, %cst_31 {dimension_numbers = #tpu.dot_dimension_numbers<[1], [0], [0], [1], [0, 0, 1, 1], [], []>} : vector<8x128xbf16>, vector<128x128xbf16>, vector<8x128xf32> -> vector<8x128xf32>
    %c0_32 = arith.constant 0 : index
    %c0_33 = arith.constant 0 : index
    %41 = vector.load %arg13[%c0_32, %c0_33] : memref<1x128xf32, #tpu.memory_space<vmem>>, vector<1x128xf32>
    %42 = vector.broadcast %41 : vector<1x128xf32> to vector<8x128xf32>
    %43 = arith.addf %40, %42 : vector<8x128xf32>
    %c0_34 = arith.constant 0 : index
    %c0_35 = arith.constant 0 : index
    %44 = vector.load %arg14[%c0_34, %c0_35] : memref<8x128xf32, #tpu.memory_space<vmem>>, vector<8x128xf32>
    tpu.vector_store %arg14[%c0_34, %c0_35], %43 {strides = array<i32>} : memref<8x128xf32, #tpu.memory_space<vmem>>, vector<8x128xf32>,
    return
  }
  func.func @transform_0(%arg0: i32) -> (i32, i32) {
    %c0_i32 = arith.constant 0 : i32
    %c0_i32_0 = arith.constant 0 : i32
    return %arg0, %c0_i32 : i32, i32
  }
  func.func @transform_1(%arg0: i32) -> (i32, i32) {
    %c0_i32 = arith.constant 0 : i32
    %c0_i32_0 = arith.constant 0 : i32
    %c0_i32_1 = arith.constant 0 : i32
    return %c0_i32, %c0_i32_0 : i32, i32
  }
  func.func @transform_2(%arg0: i32) -> (i32, i32) {
    %c0_i32 = arith.constant 0 : i32
    %c0_i32_0 = arith.constant 0 : i32
    %c0_i32_1 = arith.constant 0 : i32
    return %c0_i32, %c0_i32_0 : i32, i32
  }
  func.func @transform_3(%arg0: i32) -> (i32, i32) {
    %c0_i32 = arith.constant 0 : i32
    %c0_i32_0 = arith.constant 0 : i32
    %c0_i32_1 = arith.constant 0 : i32
    return %c0_i32, %c0_i32_0 : i32, i32
  }
  func.func @transform_4(%arg0: i32) -> (i32, i32) {
    %c0_i32 = arith.constant 0 : i32
    %c0_i32_0 = arith.constant 0 : i32
    %c0_i32_1 = arith.constant 0 : i32
    return %c0_i32, %c0_i32_0 : i32, i32
  }
  func.func @transform_5(%arg0: i32) -> (i32, i32) {
    %c0_i32 = arith.constant 0 : i32
    %c0_i32_0 = arith.constant 0 : i32
    %c0_i32_1 = arith.constant 0 : i32
    return %c0_i32, %c0_i32_0 : i32, i32
  }
  func.func @transform_6(%arg0: i32) -> (i32, i32) {
    %c0_i32 = arith.constant 0 : i32
    %c0_i32_0 = arith.constant 0 : i32
    %c0_i32_1 = arith.constant 0 : i32
    return %c0_i32, %c0_i32_0 : i32, i32
  }
  func.func @transform_7(%arg0: i32) -> (i32, i32) {
    %c0_i32 = arith.constant 0 : i32
    %c0_i32_0 = arith.constant 0 : i32
    %c0_i32_1 = arith.constant 0 : i32
    return %c0_i32, %c0_i32_0 : i32, i32
  }
  func.func @transform_8(%arg0: i32) -> (i32, i32) {
    %c0_i32 = arith.constant 0 : i32
    %c0_i32_0 = arith.constant 0 : i32
    %c0_i32_1 = arith.constant 0 : i32
    return %c0_i32, %c0_i32_0 : i32, i32
  }
  func.func @transform_9(%arg0: i32) -> (i32, i32) {
    %c0_i32 = arith.constant 0 : i32
    %c0_i32_0 = arith.constant 0 : i32
    %c0_i32_1 = arith.constant 0 : i32
    return %c0_i32, %c0_i32_0 : i32, i32
  }
  func.func @transform_10(%arg0: i32) -> (i32, i32) {
    %c0_i32 = arith.constant 0 : i32
    %c0_i32_0 = arith.constant 0 : i32
    %c0_i32_1 = arith.constant 0 : i32
    return %c0_i32, %c0_i32_0 : i32, i32
  }
  func.func @transform_11(%arg0: i32) -> (i32, i32) {
    %c0_i32 = arith.constant 0 : i32
    %c0_i32_0 = arith.constant 0 : i32
    %c0_i32_1 = arith.constant 0 : i32
    return %c0_i32, %c0_i32_0 : i32, i32
  }
  func.func @transform_12(%arg0: i32) -> (i32, i32) {
    %c0_i32 = arith.constant 0 : i32
    %c0_i32_0 = arith.constant 0 : i32
    %c0_i32_1 = arith.constant 0 : i32
    return %c0_i32, %c0_i32_0 : i32, i32
  }
  func.func @transform_13(%arg0: i32) -> (i32, i32) {
    %c0_i32 = arith.constant 0 : i32
    %c0_i32_0 = arith.constant 0 : i32
    return %arg0, %c0_i32 : i32, i32
  }
}

</mosaic_0001>

<llo_original>
// kernel: mixed_variable_dae_forward.1
$region0: #{mixed_variable_dae_forward.1}
  #allocation0 [shape = 'u32[]', space=smem, size = 0x4, offset = 0x4, fixed_abs, tag = 'smem constant byte address 0x4 - core index']
  #allocation1 [shape = 'u32[144,128]{1,0:T(1,128)}', space=vmem, size = 0x12000, scoped, tag = 'internal scratch']
  %s0 = inlined_call_operand.vmem [shape: bf16[8,128], index: 0, kind: input, shape index: {}]
  %s1 = inlined_call_operand.vmem [shape: bf16[128,128], index: 1, kind: input, shape index: {}]
  %s2 = inlined_call_operand.vmem [shape: f32[1,128], index: 2, kind: input, shape index: {}]
  %s3 = inlined_call_operand.vmem [shape: bf16[128,128], index: 3, kind: input, shape index: {}]
  %s4 = inlined_call_operand.vmem [shape: f32[1,128], index: 4, kind: input, shape index: {}]
  %s5 = inlined_call_operand.vmem [shape: bf16[128,128], index: 5, kind: input, shape index: {}]
  %s6 = inlined_call_operand.vmem [shape: f32[1,128], index: 6, kind: input, shape index: {}]
  %s7 = inlined_call_operand.vmem [shape: bf16[128,128], index: 7, kind: input, shape index: {}]
  %s8 = inlined_call_operand.vmem [shape: f32[1,128], index: 8, kind: input, shape index: {}]
  %s9 = inlined_call_operand.vmem [shape: bf16[128,128], index: 9, kind: input, shape index: {}]
  %s10 = inlined_call_operand.vmem [shape: f32[1,128], index: 10, kind: input, shape index: {}]
  %s11 = inlined_call_operand.vmem [shape: bf16[128,128], index: 11, kind: input, shape index: {}]
  %s12 = inlined_call_operand.vmem [shape: f32[1,128], index: 12, kind: input, shape index: {}]
  %s13 = inlined_call_operand.hbm [shape: f32[8,128], index: 13, kind: output, shape index: {}]
  %s14 = sld [smem:[#allocation0]]
  $region62: #{mixed_variable_dae_forward.1} parent=0
    _
  %s16 = ssub.s32 1, %s14
  %s17 = scalar_select 0, %s16, %s14
  $region1: #{mixed_variable_dae_forward.1} parent=0
    #allocation2 [shape = 'u8[4096]{0}', space=vmem, size = 0x1000, scoped, tag = 'output window, operand 0, single buffered']
    #allocation3 [shape = 's32[1]{0}', space=sflag, size = 0x4, scoped, tag = 'scoped memory for mixed_variable_dae_forward.1']
    %18 = vsyncpa [#allocation3], 0
    // Predicated region
    $region2: #{mixed_variable_dae_forward.1} parent=1 // pred_check
      _
    $region3: #{mixed_variable_dae_forward.1} parent=1 // pred_check_branch
      %20 = sbr.rel (0) target = $region5
    $region4: #{mixed_variable_dae_forward.1} parent=1 // pred_region
      _
    $region5: #{mixed_variable_dae_forward.1} parent=1 // pred_fallthru
      _
    // Predicated region
    $region6: #{mixed_variable_dae_forward.1} parent=1 // pred_check
      _
    $region7: #{mixed_variable_dae_forward.1} parent=1 // pred_check_branch
      %22 = sbr.rel (0) target = $region9
    $region8: #{mixed_variable_dae_forward.1} parent=1 // pred_region
      _
    $region9: #{mixed_variable_dae_forward.1} parent=1 // pred_fallthru
      _
    // Predicated region
    $region10: #{mixed_variable_dae_forward.1} parent=1 // pred_check
      _
    $region11: #{mixed_variable_dae_forward.1} parent=1 // pred_check_branch
      %24 = sbr.rel (0) target = $region13
    $region12: #{mixed_variable_dae_forward.1} parent=1 // pred_region
      _
    $region13: #{mixed_variable_dae_forward.1} parent=1 // pred_fallthru
      _
    // Predicated region
    $region14: #{mixed_variable_dae_forward.1} parent=1 // pred_check
      _
    $region15: #{mixed_variable_dae_forward.1} parent=1 // pred_check_branch
      %26 = sbr.rel (0) target = $region17
    $region16: #{mixed_variable_dae_forward.1} parent=1 // pred_region
      _
    $region17: #{mixed_variable_dae_forward.1} parent=1 // pred_fallthru
      _
    // Predicated region
    $region18: #{mixed_variable_dae_forward.1} parent=1 // pred_check
      _
    $region19: #{mixed_variable_dae_forward.1} parent=1 // pred_check_branch
      %28 = sbr.rel (0) target = $region21
    $region20: #{mixed_variable_dae_forward.1} parent=1 // pred_region
      _
    $region21: #{mixed_variable_dae_forward.1} parent=1 // pred_fallthru
      _
    // Predicated region
    $region22: #{mixed_variable_dae_forward.1} parent=1 // pred_check
      _
    $region23: #{mixed_variable_dae_forward.1} parent=1 // pred_check_branch
      %30 = sbr.rel (0) target = $region25
    $region24: #{mixed_variable_dae_forward.1} parent=1 // pred_region
      _
    $region25: #{mixed_variable_dae_forward.1} parent=1 // pred_fallthru
      _
    // Predicated region
    $region26: #{mixed_variable_dae_forward.1} parent=1 // pred_check
      _
    $region27: #{mixed_variable_dae_forward.1} parent=1 // pred_check_branch
      %32 = sbr.rel (0) target = $region29
    $region28: #{mixed_variable_dae_forward.1} parent=1 // pred_region
      _
    $region29: #{mixed_variable_dae_forward.1} parent=1 // pred_fallthru
      _
    // Predicated region
    $region30: #{mixed_variable_dae_forward.1} parent=1 // pred_check
      _
    $region31: #{mixed_variable_dae_forward.1} parent=1 // pred_check_branch
      %34 = sbr.rel (0) target = $region33
    $region32: #{mixed_variable_dae_forward.1} parent=1 // pred_region
      _
    $region33: #{mixed_variable_dae_forward.1} parent=1 // pred_fallthru
      _
    // Predicated region
    $region34: #{mixed_variable_dae_forward.1} parent=1 // pred_check
      _
    $region35: #{mixed_variable_dae_forward.1} parent=1 // pred_check_branch
      %36 = sbr.rel (0) target = $region37
    $region36: #{mixed_variable_dae_forward.1} parent=1 // pred_region
      _
    $region37: #{mixed_variable_dae_forward.1} parent=1 // pred_fallthru
      _
    // Predicated region
    $region38: #{mixed_variable_dae_forward.1} parent=1 // pred_check
      _
    $region39: #{mixed_variable_dae_forward.1} parent=1 // pred_check_branch
      %38 = sbr.rel (0) target = $region41
    $region40: #{mixed_variable_dae_forward.1} parent=1 // pred_region
      _
    $region41: #{mixed_variable_dae_forward.1} parent=1 // pred_fallthru
      _
    // Predicated region
    $region42: #{mixed_variable_dae_forward.1} parent=1 // pred_check
      _
    $region43: #{mixed_variable_dae_forward.1} parent=1 // pred_check_branch
      %40 = sbr.rel (0) target = $region45
    $region44: #{mixed_variable_dae_forward.1} parent=1 // pred_region
      _
    $region45: #{mixed_variable_dae_forward.1} parent=1 // pred_fallthru
      _
    // Predicated region
    $region46: #{mixed_variable_dae_forward.1} parent=1 // pred_check
      _
    $region47: #{mixed_variable_dae_forward.1} parent=1 // pred_check_branch
      %42 = sbr.rel (0) target = $region49
    $region48: #{mixed_variable_dae_forward.1} parent=1 // pred_region
      _
    $region49: #{mixed_variable_dae_forward.1} parent=1 // pred_fallthru
      _
    // Predicated region
    $region50: #{mixed_variable_dae_forward.1} parent=1 // pred_check
      _
    $region51: #{mixed_variable_dae_forward.1} parent=1 // pred_check_branch
      %44 = sbr.rel (0) target = $region53
    $region52: #{mixed_variable_dae_forward.1} parent=1 // pred_region
      _
    $region53: #{mixed_variable_dae_forward.1} parent=1 // pred_fallthru
      _
    %v46 = vld [vmem:[%s0] sm:$0xf]
    %v47 = vld [vmem:[%s1] sm:$0xf]
    %v48 = vld [vmem:[%s1 + $0x4] sm:$0xf]
    %v49 = vld [vmem:[%s1 + $0x8] sm:$0xf]
    %v50 = vld [vmem:[%s1 + $0xc] sm:$0xf]
    %v51 = vld [vmem:[%s1 + $0x10] sm:$0xf]
    %v52 = vld [vmem:[%s1 + $0x14] sm:$0xf]
    %v53 = vld [vmem:[%s1 + $0x18] sm:$0xf]
    %v54 = vld [vmem:[%s1 + $0x1c] sm:$0xf]
    %v55 = vld [vmem:[%s1 + $0x20] sm:$0xf]
    %v56 = vld [vmem:[%s1 + $0x24] sm:$0xf]
    %v57 = vld [vmem:[%s1 + $0x28] sm:$0xf]
    %v58 = vld [vmem:[%s1 + $0x2c] sm:$0xf]
    %v59 = vld [vmem:[%s1 + $0x30] sm:$0xf]
    %v60 = vld [vmem:[%s1 + $0x34] sm:$0xf]
    %v61 = vld [vmem:[%s1 + $0x38] sm:$0xf]
    %v62 = vld [vmem:[%s1 + $0x3c] sm:$0xf]
    %v63 = vld [vmem:[%s2] sm:$0x1]
    %v65 = vlaneseq
    %v66 = vshrl.u32 %v65, 7
    %v67 = vsub.s32 0, %v66
    %v68 = vrot.slane %v63, %v67
    %v86 = vunpack.c.l.b16 %v47
    %v87 = vunpack.c.l.b16 %v48
    %v88 = vunpack.c.l.b16 %v49
    %v89 = vunpack.c.l.b16 %v50
    %v90 = vunpack.c.l.b16 %v51
    %v91 = vunpack.c.l.b16 %v52
    %v92 = vunpack.c.l.b16 %v53
    %v93 = vunpack.c.l.b16 %v54
    %v94 = vunpack.c.l.b16 %v55
    %v95 = vunpack.c.l.b16 %v56
    %v96 = vunpack.c.l.b16 %v57
    %v97 = vunpack.c.l.b16 %v58
    %v98 = vunpack.c.l.b16 %v59
    %v99 = vunpack.c.l.b16 %v60
    %v100 = vunpack.c.l.b16 %v61
    %v101 = vunpack.c.l.b16 %v62
    %v102 = vpack.c.b16 %v87, %v86
    %v103 = vpack.c.b16 %v89, %v88
    %v104 = vpack.c.b16 %v91, %v90
    %v105 = vpack.c.b16 %v93, %v92
    %v106 = vpack.c.b16 %v95, %v94
    %v107 = vpack.c.b16 %v97, %v96
    %v108 = vpack.c.b16 %v99, %v98
    %v109 = vpack.c.b16 %v101, %v100
    %118 = vmatprep.subr.bf16.mxu0 0
    %119 = vmatpush1.bf16.msra.mxu0 %v102
    %120 = vmatprep.subr.bf16.mxu0 0
    %121 = vmatpush1.bf16.msra.mxu0 %v103
    %122 = vmatprep.subr.bf16.mxu0 0
    %123 = vmatpush1.bf16.msra.mxu0 %v104
    %124 = vmatprep.subr.bf16.mxu0 0
    %125 = vmatpush1.bf16.msra.mxu0 %v105
    %126 = vmatprep.subr.bf16.mxu0 0
    %127 = vmatpush1.bf16.msra.mxu0 %v106
    %128 = vmatprep.subr.bf16.mxu0 0
    %129 = vmatpush1.bf16.msra.mxu0 %v107
    %130 = vmatprep.subr.bf16.mxu0 0
    %131 = vmatpush1.bf16.msra.mxu0 %v108
    %132 = vmatprep.subr.bf16.mxu0 0
    %133 = vmatpush1.bf16.msra.mxu0 %v109
    %134 = vmatprep.subr.bf16.mxu0 0
    %135 = vmatpush1.bf16.msra.mxu0 0
    %136 = vmatprep.subr.bf16.mxu0 0
    %137 = vmatpush1.bf16.msra.mxu0 0
    %138 = vmatprep.subr.bf16.mxu0 0
    %139 = vmatpush1.bf16.msra.mxu0 0
    %140 = vmatprep.subr.bf16.mxu0 0
    %141 = vmatpush1.bf16.msra.mxu0 0
    %142 = vmatprep.subr.bf16.mxu0 0
    %143 = vmatpush1.bf16.msra.mxu0 0
    %144 = vmatprep.subr.bf16.mxu0 0
    %145 = vmatpush1.bf16.msra.mxu0 0
    %146 = vmatprep.subr.bf16.mxu0 0
    %147 = vmatpush1.bf16.msra.mxu0 0
    %148 = vmatprep.subr.bf16.mxu0 0
    %149 = vmatpush1.bf16.msra.mxu0 0
    %150 = vmatprep.mubr.bf16.mxu0 0
    %151 = vmatmul.mubr.bf16.gmra.mrb[0].mxu0 %v46
    %v152 = vpop.f32.mrb[0].mxu0
    %v153 = vadd.f32 %v68, %v152
    %v154 = vpop.f32.mrb[0].mxu0
    %v155 = vpop.f32.mrb[0].mxu0
    %v156 = vpop.f32.mrb[0].mxu0
    %157 = vdwg.mxu0
    %v158 = vmax.f32 %v153, 0.0
    %v159 = vpack.c.bf16 %v158, %v158
    %v160 = vld [vmem:[%s3] sm:$0xf]
    %v161 = vld [vmem:[%s3 + $0x4] sm:$0xf]
    %v162 = vld [vmem:[%s3 + $0x8] sm:$0xf]
    %v163 = vld [vmem:[%s3 + $0xc] sm:$0xf]
    %v164 = vld [vmem:[%s3 + $0x10] sm:$0xf]
    %v165 = vld [vmem:[%s3 + $0x14] sm:$0xf]
    %v166 = vld [vmem:[%s3 + $0x18] sm:$0xf]
    %v167 = vld [vmem:[%s3 + $0x1c] sm:$0xf]
    %v168 = vld [vmem:[%s3 + $0x20] sm:$0xf]
    %v169 = vld [vmem:[%s3 + $0x24] sm:$0xf]
    %v170 = vld [vmem:[%s3 + $0x28] sm:$0xf]
    %v171 = vld [vmem:[%s3 + $0x2c] sm:$0xf]
    %v172 = vld [vmem:[%s3 + $0x30] sm:$0xf]
    %v173 = vld [vmem:[%s3 + $0x34] sm:$0xf]
    %v174 = vld [vmem:[%s3 + $0x38] sm:$0xf]
    %v175 = vld [vmem:[%s3 + $0x3c] sm:$0xf]
    %v176 = vld [vmem:[%s4] sm:$0x1]
    %v178 = vlaneseq
    %v179 = vshrl.u32 %v178, 7
    %v180 = vsub.s32 0, %v179
    %v181 = vrot.slane %v176, %v180
    %v199 = vunpack.c.l.b16 %v160
    %v200 = vunpack.c.l.b16 %v161
    %v201 = vunpack.c.l.b16 %v162
    %v202 = vunpack.c.l.b16 %v163
    %v203 = vunpack.c.l.b16 %v164
    %v204 = vunpack.c.l.b16 %v165
    %v205 = vunpack.c.l.b16 %v166
    %v206 = vunpack.c.l.b16 %v167
    %v207 = vunpack.c.l.b16 %v168
    %v208 = vunpack.c.l.b16 %v169
    %v209 = vunpack.c.l.b16 %v170
    %v210 = vunpack.c.l.b16 %v171
    %v211 = vunpack.c.l.b16 %v172
    %v212 = vunpack.c.l.b16 %v173
    %v213 = vunpack.c.l.b16 %v174
    %v214 = vunpack.c.l.b16 %v175
    %v215 = vpack.c.b16 %v200, %v199
    %v216 = vpack.c.b16 %v202, %v201
    %v217 = vpack.c.b16 %v204, %v203
    %v218 = vpack.c.b16 %v206, %v205
    %v219 = vpack.c.b16 %v208, %v207
    %v220 = vpack.c.b16 %v210, %v209
    %v221 = vpack.c.b16 %v212, %v211
    %v222 = vpack.c.b16 %v214, %v213
    %231 = vmatprep.subr.bf16.mxu0 0
    %232 = vmatpush1.bf16.msra.mxu0 %v215
    %233 = vmatprep.subr.bf16.mxu0 0
    %234 = vmatpush1.bf16.msra.mxu0 %v216
    %235 = vmatprep.subr.bf16.mxu0 0
    %236 = vmatpush1.bf16.msra.mxu0 %v217
    %237 = vmatprep.subr.bf16.mxu0 0
    %238 = vmatpush1.bf16.msra.mxu0 %v218
    %239 = vmatprep.subr.bf16.mxu0 0
    %240 = vmatpush1.bf16.msra.mxu0 %v219
    %241 = vmatprep.subr.bf16.mxu0 0
    %242 = vmatpush1.bf16.msra.mxu0 %v220
    %243 = vmatprep.subr.bf16.mxu0 0
    %244 = vmatpush1.bf16.msra.mxu0 %v221
    %245 = vmatprep.subr.bf16.mxu0 0
    %246 = vmatpush1.bf16.msra.mxu0 %v222
    %247 = vmatprep.subr.bf16.mxu0 0
    %248 = vmatpush1.bf16.msra.mxu0 0
    %249 = vmatprep.subr.bf16.mxu0 0
    %250 = vmatpush1.bf16.msra.mxu0 0
    %251 = vmatprep.subr.bf16.mxu0 0
    %252 = vmatpush1.bf16.msra.mxu0 0
    %253 = vmatprep.subr.bf16.mxu0 0
    %254 = vmatpush1.bf16.msra.mxu0 0
    %255 = vmatprep.subr.bf16.mxu0 0
    %256 = vmatpush1.bf16.msra.mxu0 0
    %257 = vmatprep.subr.bf16.mxu0 0
    %258 = vmatpush1.bf16.msra.mxu0 0
    %259 = vmatprep.subr.bf16.mxu0 0
    %260 = vmatpush1.bf16.msra.mxu0 0
    %261 = vmatprep.subr.bf16.mxu0 0
    %262 = vmatpush1.bf16.msra.mxu0 0
    %263 = vmatprep.mubr.bf16.mxu0 0
    %264 = vmatmul.mubr.bf16.gmra.mrb[0].mxu0 %v159
    %v265 = vpop.f32.mrb[0].mxu0
    %v266 = vadd.f32 %v181, %v265
    %v267 = vpop.f32.mrb[0].mxu0
    %v268 = vpop.f32.mrb[0].mxu0
    %v269 = vpop.f32.mrb[0].mxu0
    %270 = vdwg.mxu0
    %v271 = vmax.f32 %v266, 0.0
    %v272 = vpack.c.bf16 %v271, %v271
    %v273 = vld [vmem:[%s5] sm:$0xf]
    %v274 = vld [vmem:[%s5 + $0x4] sm:$0xf]
    %v275 = vld [vmem:[%s5 + $0x8] sm:$0xf]
    %v276 = vld [vmem:[%s5 + $0xc] sm:$0xf]
    %v277 = vld [vmem:[%s5 + $0x10] sm:$0xf]
    %v278 = vld [vmem:[%s5 + $0x14] sm:$0xf]
    %v279 = vld [vmem:[%s5 + $0x18] sm:$0xf]
    %v280 = vld [vmem:[%s5 + $0x1c] sm:$0xf]
    %v281 = vld [vmem:[%s5 + $0x20] sm:$0xf]
    %v282 = vld [vmem:[%s5 + $0x24] sm:$0xf]
    %v283 = vld [vmem:[%s5 + $0x28] sm:$0xf]
    %v284 = vld [vmem:[%s5 + $0x2c] sm:$0xf]
    %v285 = vld [vmem:[%s5 + $0x30] sm:$0xf]
    %v286 = vld [vmem:[%s5 + $0x34] sm:$0xf]
    %v287 = vld [vmem:[%s5 + $0x38] sm:$0xf]
    %v288 = vld [vmem:[%s5 + $0x3c] sm:$0xf]
    %v289 = vld [vmem:[%s6] sm:$0x1]
    %v291 = vlaneseq
    %v292 = vshrl.u32 %v291, 7
    %v293 = vsub.s32 0, %v292
    %v294 = vrot.slane %v289, %v293
    %v312 = vunpack.c.l.b16 %v273
    %v313 = vunpack.c.l.b16 %v274
    %v314 = vunpack.c.l.b16 %v275
    %v315 = vunpack.c.l.b16 %v276
    %v316 = vunpack.c.l.b16 %v277
    %v317 = vunpack.c.l.b16 %v278
    %v318 = vunpack.c.l.b16 %v279
    %v319 = vunpack.c.l.b16 %v280
    %v320 = vunpack.c.l.b16 %v281
    %v321 = vunpack.c.l.b16 %v282
    %v322 = vunpack.c.l.b16 %v283
    %v323 = vunpack.c.l.b16 %v284
    %v324 = vunpack.c.l.b16 %v285
    %v325 = vunpack.c.l.b16 %v286
    %v326 = vunpack.c.l.b16 %v287
    %v327 = vunpack.c.l.b16 %v288
    %v328 = vpack.c.b16 %v313, %v312
    %v329 = vpack.c.b16 %v315, %v314
    %v330 = vpack.c.b16 %v317, %v316
    %v331 = vpack.c.b16 %v319, %v318
    %v332 = vpack.c.b16 %v321, %v320
    %v333 = vpack.c.b16 %v323, %v322
    %v334 = vpack.c.b16 %v325, %v324
    %v335 = vpack.c.b16 %v327, %v326
    %344 = vmatprep.subr.bf16.mxu0 0
    %345 = vmatpush1.bf16.msra.mxu0 %v328
    %346 = vmatprep.subr.bf16.mxu0 0
    %347 = vmatpush1.bf16.msra.mxu0 %v329
    %348 = vmatprep.subr.bf16.mxu0 0
    %349 = vmatpush1.bf16.msra.mxu0 %v330
    %350 = vmatprep.subr.bf16.mxu0 0
    %351 = vmatpush1.bf16.msra.mxu0 %v331
    %352 = vmatprep.subr.bf16.mxu0 0
    %353 = vmatpush1.bf16.msra.mxu0 %v332
    %354 = vmatprep.subr.bf16.mxu0 0
    %355 = vmatpush1.bf16.msra.mxu0 %v333
    %356 = vmatprep.subr.bf16.mxu0 0
    %357 = vmatpush1.bf16.msra.mxu0 %v334
    %358 = vmatprep.subr.bf16.mxu0 0
    %359 = vmatpush1.bf16.msra.mxu0 %v335
    %360 = vmatprep.subr.bf16.mxu0 0
    %361 = vmatpush1.bf16.msra.mxu0 0
    %362 = vmatprep.subr.bf16.mxu0 0
    %363 = vmatpush1.bf16.msra.mxu0 0
    %364 = vmatprep.subr.bf16.mxu0 0
    %365 = vmatpush1.bf16.msra.mxu0 0
    %366 = vmatprep.subr.bf16.mxu0 0
    %367 = vmatpush1.bf16.msra.mxu0 0
    %368 = vmatprep.subr.bf16.mxu0 0
    %369 = vmatpush1.bf16.msra.mxu0 0
    %370 = vmatprep.subr.bf16.mxu0 0
    %371 = vmatpush1.bf16.msra.mxu0 0
    %372 = vmatprep.subr.bf16.mxu0 0
    %373 = vmatpush1.bf16.msra.mxu0 0
    %374 = vmatprep.subr.bf16.mxu0 0
    %375 = vmatpush1.bf16.msra.mxu0 0
    %376 = vmatprep.mubr.bf16.mxu0 0
    %377 = vmatmul.mubr.bf16.gmra.mrb[0].mxu0 %v272
    %v378 = vpop.f32.mrb[0].mxu0
    %v379 = vadd.f32 %v294, %v378
    %v380 = vpop.f32.mrb[0].mxu0
    %v381 = vpop.f32.mrb[0].mxu0
    %v382 = vpop.f32.mrb[0].mxu0
    %383 = vdwg.mxu0
    %v384 = vpack.c.bf16 %v379, %v379
    %v385 = vld [vmem:[%s7] sm:$0xf]
    %v386 = vld [vmem:[%s7 + $0x4] sm:$0xf]
    %v387 = vld [vmem:[%s7 + $0x8] sm:$0xf]
    %v388 = vld [vmem:[%s7 + $0xc] sm:$0xf]
    %v389 = vld [vmem:[%s7 + $0x10] sm:$0xf]
    %v390 = vld [vmem:[%s7 + $0x14] sm:$0xf]
    %v391 = vld [vmem:[%s7 + $0x18] sm:$0xf]
    %v392 = vld [vmem:[%s7 + $0x1c] sm:$0xf]
    %v393 = vld [vmem:[%s7 + $0x20] sm:$0xf]
    %v394 = vld [vmem:[%s7 + $0x24] sm:$0xf]
    %v395 = vld [vmem:[%s7 + $0x28] sm:$0xf]
    %v396 = vld [vmem:[%s7 + $0x2c] sm:$0xf]
    %v397 = vld [vmem:[%s7 + $0x30] sm:$0xf]
    %v398 = vld [vmem:[%s7 + $0x34] sm:$0xf]
    %v399 = vld [vmem:[%s7 + $0x38] sm:$0xf]
    %v400 = vld [vmem:[%s7 + $0x3c] sm:$0xf]
    %v401 = vld [vmem:[%s8] sm:$0x1]
    %v403 = vlaneseq
    %v404 = vshrl.u32 %v403, 7
    %v405 = vsub.s32 0, %v404
    %v406 = vrot.slane %v401, %v405
    %v424 = vunpack.c.l.b16 %v385
    %v425 = vunpack.c.l.b16 %v386
    %v426 = vunpack.c.l.b16 %v387
    %v427 = vunpack.c.l.b16 %v388
    %v428 = vunpack.c.l.b16 %v389
    %v429 = vunpack.c.l.b16 %v390
    %v430 = vunpack.c.l.b16 %v391
    %v431 = vunpack.c.l.b16 %v392
    %v432 = vunpack.c.l.b16 %v393
    %v433 = vunpack.c.l.b16 %v394
    %v434 = vunpack.c.l.b16 %v395
    %v435 = vunpack.c.l.b16 %v396
    %v436 = vunpack.c.l.b16 %v397
    %v437 = vunpack.c.l.b16 %v398
    %v438 = vunpack.c.l.b16 %v399
    %v439 = vunpack.c.l.b16 %v400
    %v440 = vpack.c.b16 %v425, %v424
    %v441 = vpack.c.b16 %v427, %v426
    %v442 = vpack.c.b16 %v429, %v428
    %v443 = vpack.c.b16 %v431, %v430
    %v444 = vpack.c.b16 %v433, %v432
    %v445 = vpack.c.b16 %v435, %v434
    %v446 = vpack.c.b16 %v437, %v436
    %v447 = vpack.c.b16 %v439, %v438
    %456 = vmatprep.subr.bf16.mxu0 0
    %457 = vmatpush1.bf16.msra.mxu0 %v440
    %458 = vmatprep.subr.bf16.mxu0 0
    %459 = vmatpush1.bf16.msra.mxu0 %v441
    %460 = vmatprep.subr.bf16.mxu0 0
    %461 = vmatpush1.bf16.msra.mxu0 %v442
    %462 = vmatprep.subr.bf16.mxu0 0
    %463 = vmatpush1.bf16.msra.mxu0 %v443
    %464 = vmatprep.subr.bf16.mxu0 0
    %465 = vmatpush1.bf16.msra.mxu0 %v444
    %466 = vmatprep.subr.bf16.mxu0 0
    %467 = vmatpush1.bf16.msra.mxu0 %v445
    %468 = vmatprep.subr.bf16.mxu0 0
    %469 = vmatpush1.bf16.msra.mxu0 %v446
    %470 = vmatprep.subr.bf16.mxu0 0
    %471 = vmatpush1.bf16.msra.mxu0 %v447
    %472 = vmatprep.subr.bf16.mxu0 0
    %473 = vmatpush1.bf16.msra.mxu0 0
    %474 = vmatprep.subr.bf16.mxu0 0
    %475 = vmatpush1.bf16.msra.mxu0 0
    %476 = vmatprep.subr.bf16.mxu0 0
    %477 = vmatpush1.bf16.msra.mxu0 0
    %478 = vmatprep.subr.bf16.mxu0 0
    %479 = vmatpush1.bf16.msra.mxu0 0
    %480 = vmatprep.subr.bf16.mxu0 0
    %481 = vmatpush1.bf16.msra.mxu0 0
    %482 = vmatprep.subr.bf16.mxu0 0
    %483 = vmatpush1.bf16.msra.mxu0 0
    %484 = vmatprep.subr.bf16.mxu0 0
    %485 = vmatpush1.bf16.msra.mxu0 0
    %486 = vmatprep.subr.bf16.mxu0 0
    %487 = vmatpush1.bf16.msra.mxu0 0
    %488 = vmatprep.mubr.bf16.mxu0 0
    %489 = vmatmul.mubr.bf16.gmra.mrb[0].mxu0 %v384
    %v490 = vpop.f32.mrb[0].mxu0
    %v491 = vadd.f32 %v406, %v490
    %v492 = vpop.f32.mrb[0].mxu0
    %v493 = vpop.f32.mrb[0].mxu0
    %v494 = vpop.f32.mrb[0].mxu0
    %495 = vdwg.mxu0
    %v496 = vmax.f32 %v491, 0.0
    %v497 = vpack.c.bf16 %v496, %v496
    %v498 = vld [vmem:[%s9] sm:$0xf]
    %v499 = vld [vmem:[%s9 + $0x4] sm:$0xf]
    %v500 = vld [vmem:[%s9 + $0x8] sm:$0xf]
    %v501 = vld [vmem:[%s9 + $0xc] sm:$0xf]
    %v502 = vld [vmem:[%s9 + $0x10] sm:$0xf]
    %v503 = vld [vmem:[%s9 + $0x14] sm:$0xf]
    %v504 = vld [vmem:[%s9 + $0x18] sm:$0xf]
    %v505 = vld [vmem:[%s9 + $0x1c] sm:$0xf]
    %v506 = vld [vmem:[%s9 + $0x20] sm:$0xf]
    %v507 = vld [vmem:[%s9 + $0x24] sm:$0xf]
    %v508 = vld [vmem:[%s9 + $0x28] sm:$0xf]
    %v509 = vld [vmem:[%s9 + $0x2c] sm:$0xf]
    %v510 = vld [vmem:[%s9 + $0x30] sm:$0xf]
    %v511 = vld [vmem:[%s9 + $0x34] sm:$0xf]
    %v512 = vld [vmem:[%s9 + $0x38] sm:$0xf]
    %v513 = vld [vmem:[%s9 + $0x3c] sm:$0xf]
    %v514 = vld [vmem:[%s10] sm:$0x1]
    %v516 = vlaneseq
    %v517 = vshrl.u32 %v516, 7
    %v518 = vsub.s32 0, %v517
    %v519 = vrot.slane %v514, %v518
    %v537 = vunpack.c.l.b16 %v498
    %v538 = vunpack.c.l.b16 %v499
    %v539 = vunpack.c.l.b16 %v500
    %v540 = vunpack.c.l.b16 %v501
    %v541 = vunpack.c.l.b16 %v502
    %v542 = vunpack.c.l.b16 %v503
    %v543 = vunpack.c.l.b16 %v504
    %v544 = vunpack.c.l.b16 %v505
    %v545 = vunpack.c.l.b16 %v506
    %v546 = vunpack.c.l.b16 %v507
    %v547 = vunpack.c.l.b16 %v508
    %v548 = vunpack.c.l.b16 %v509
    %v549 = vunpack.c.l.b16 %v510
    %v550 = vunpack.c.l.b16 %v511
    %v551 = vunpack.c.l.b16 %v512
    %v552 = vunpack.c.l.b16 %v513
    %v553 = vpack.c.b16 %v538, %v537
    %v554 = vpack.c.b16 %v540, %v539
    %v555 = vpack.c.b16 %v542, %v541
    %v556 = vpack.c.b16 %v544, %v543
    %v557 = vpack.c.b16 %v546, %v545
    %v558 = vpack.c.b16 %v548, %v547
    %v559 = vpack.c.b16 %v550, %v549
    %v560 = vpack.c.b16 %v552, %v551
    %569 = vmatprep.subr.bf16.mxu0 0
    %570 = vmatpush1.bf16.msra.mxu0 %v553
    %571 = vmatprep.subr.bf16.mxu0 0
    %572 = vmatpush1.bf16.msra.mxu0 %v554
    %573 = vmatprep.subr.bf16.mxu0 0
    %574 = vmatpush1.bf16.msra.mxu0 %v555
    %575 = vmatprep.subr.bf16.mxu0 0
    %576 = vmatpush1.bf16.msra.mxu0 %v556
    %577 = vmatprep.subr.bf16.mxu0 0
    %578 = vmatpush1.bf16.msra.mxu0 %v557
    %579 = vmatprep.subr.bf16.mxu0 0
    %580 = vmatpush1.bf16.msra.mxu0 %v558
    %581 = vmatprep.subr.bf16.mxu0 0
    %582 = vmatpush1.bf16.msra.mxu0 %v559
    %583 = vmatprep.subr.bf16.mxu0 0
    %584 = vmatpush1.bf16.msra.mxu0 %v560
    %585 = vmatprep.subr.bf16.mxu0 0
    %586 = vmatpush1.bf16.msra.mxu0 0
    %587 = vmatprep.subr.bf16.mxu0 0
    %588 = vmatpush1.bf16.msra.mxu0 0
    %589 = vmatprep.subr.bf16.mxu0 0
    %590 = vmatpush1.bf16.msra.mxu0 0
    %591 = vmatprep.subr.bf16.mxu0 0
    %592 = vmatpush1.bf16.msra.mxu0 0
    %593 = vmatprep.subr.bf16.mxu0 0
    %594 = vmatpush1.bf16.msra.mxu0 0
    %595 = vmatprep.subr.bf16.mxu0 0
    %596 = vmatpush1.bf16.msra.mxu0 0
    %597 = vmatprep.subr.bf16.mxu0 0
    %598 = vmatpush1.bf16.msra.mxu0 0
    %599 = vmatprep.subr.bf16.mxu0 0
    %600 = vmatpush1.bf16.msra.mxu0 0
    %601 = vmatprep.mubr.bf16.mxu0 0
    %602 = vmatmul.mubr.bf16.gmra.mrb[0].mxu0 %v497
    %v603 = vpop.f32.mrb[0].mxu0
    %v604 = vadd.f32 %v519, %v603
    %v605 = vpop.f32.mrb[0].mxu0
    %v606 = vpop.f32.mrb[0].mxu0
    %v607 = vpop.f32.mrb[0].mxu0
    %608 = vdwg.mxu0
    %v609 = vmax.f32 %v604, 0.0
    %v610 = vpack.c.bf16 %v609, %v609
    %v611 = vld [vmem:[%s11] sm:$0xf]
    %v612 = vld [vmem:[%s11 + $0x4] sm:$0xf]
    %v613 = vld [vmem:[%s11 + $0x8] sm:$0xf]
    %v614 = vld [vmem:[%s11 + $0xc] sm:$0xf]
    %v615 = vld [vmem:[%s11 + $0x10] sm:$0xf]
    %v616 = vld [vmem:[%s11 + $0x14] sm:$0xf]
    %v617 = vld [vmem:[%s11 + $0x18] sm:$0xf]
    %v618 = vld [vmem:[%s11 + $0x1c] sm:$0xf]
    %v619 = vld [vmem:[%s11 + $0x20] sm:$0xf]
    %v620 = vld [vmem:[%s11 + $0x24] sm:$0xf]
    %v621 = vld [vmem:[%s11 + $0x28] sm:$0xf]
    %v622 = vld [vmem:[%s11 + $0x2c] sm:$0xf]
    %v623 = vld [vmem:[%s11 + $0x30] sm:$0xf]
    %v624 = vld [vmem:[%s11 + $0x34] sm:$0xf]
    %v625 = vld [vmem:[%s11 + $0x38] sm:$0xf]
    %v626 = vld [vmem:[%s11 + $0x3c] sm:$0xf]
    %v627 = vld [vmem:[%s12] sm:$0x1]
    %v629 = vlaneseq
    %v630 = vshrl.u32 %v629, 7
    %v631 = vsub.s32 0, %v630
    %v632 = vrot.slane %v627, %v631
    %v650 = vunpack.c.l.b16 %v611
    %v651 = vunpack.c.l.b16 %v612
    %v652 = vunpack.c.l.b16 %v613
    %v653 = vunpack.c.l.b16 %v614
    %v654 = vunpack.c.l.b16 %v615
    %v655 = vunpack.c.l.b16 %v616
    %v656 = vunpack.c.l.b16 %v617
    %v657 = vunpack.c.l.b16 %v618
    %v658 = vunpack.c.l.b16 %v619
    %v659 = vunpack.c.l.b16 %v620
    %v660 = vunpack.c.l.b16 %v621
    %v661 = vunpack.c.l.b16 %v622
    %v662 = vunpack.c.l.b16 %v623
    %v663 = vunpack.c.l.b16 %v624
    %v664 = vunpack.c.l.b16 %v625
    %v665 = vunpack.c.l.b16 %v626
    %v666 = vpack.c.b16 %v651, %v650
    %v667 = vpack.c.b16 %v653, %v652
    %v668 = vpack.c.b16 %v655, %v654
    %v669 = vpack.c.b16 %v657, %v656
    %v670 = vpack.c.b16 %v659, %v658
    %v671 = vpack.c.b16 %v661, %v660
    %v672 = vpack.c.b16 %v663, %v662
    %v673 = vpack.c.b16 %v665, %v664
    %682 = vmatprep.subr.bf16.mxu0 0
    %683 = vmatpush1.bf16.msra.mxu0 %v666
    %684 = vmatprep.subr.bf16.mxu0 0
    %685 = vmatpush1.bf16.msra.mxu0 %v667
    %686 = vmatprep.subr.bf16.mxu0 0
    %687 = vmatpush1.bf16.msra.mxu0 %v668
    %688 = vmatprep.subr.bf16.mxu0 0
    %689 = vmatpush1.bf16.msra.mxu0 %v669
    %690 = vmatprep.subr.bf16.mxu0 0
    %691 = vmatpush1.bf16.msra.mxu0 %v670
    %692 = vmatprep.subr.bf16.mxu0 0
    %693 = vmatpush1.bf16.msra.mxu0 %v671
    %694 = vmatprep.subr.bf16.mxu0 0
    %695 = vmatpush1.bf16.msra.mxu0 %v672
    %696 = vmatprep.subr.bf16.mxu0 0
    %697 = vmatpush1.bf16.msra.mxu0 %v673
    %698 = vmatprep.subr.bf16.mxu0 0
    %699 = vmatpush1.bf16.msra.mxu0 0
    %700 = vmatprep.subr.bf16.mxu0 0
    %701 = vmatpush1.bf16.msra.mxu0 0
    %702 = vmatprep.subr.bf16.mxu0 0
    %703 = vmatpush1.bf16.msra.mxu0 0
    %704 = vmatprep.subr.bf16.mxu0 0
    %705 = vmatpush1.bf16.msra.mxu0 0
    %706 = vmatprep.subr.bf16.mxu0 0
    %707 = vmatpush1.bf16.msra.mxu0 0
    %708 = vmatprep.subr.bf16.mxu0 0
    %709 = vmatpush1.bf16.msra.mxu0 0
    %710 = vmatprep.subr.bf16.mxu0 0
    %711 = vmatpush1.bf16.msra.mxu0 0
    %712 = vmatprep.subr.bf16.mxu0 0
    %713 = vmatpush1.bf16.msra.mxu0 0
    %714 = vmatprep.mubr.bf16.mxu0 0
    %715 = vmatmul.mubr.bf16.gmra.mrb[0].mxu0 %v610
    %v716 = vpop.f32.mrb[0].mxu0
    %v717 = vadd.f32 %v632, %v716
    %v718 = vpop.f32.mrb[0].mxu0
    %v719 = vpop.f32.mrb[0].mxu0
    %v720 = vpop.f32.mrb[0].mxu0
    %721 = vdwg.mxu0
    %722 = vst [vmem:[#allocation2] sm:$0xff] %v717
    // Predicated region
    $region54: #{mixed_variable_dae_forward.1} parent=1 // pred_check
      _
    $region55: #{mixed_variable_dae_forward.1} parent=1 // pred_check_branch
      %724 = sbr.rel (0) target = $region57
    $region56: #{mixed_variable_dae_forward.1} parent=1 // pred_region
      %s726 = ssub.s32 128, 128
      %727 = vsyncadd [#allocation3], %s726
      %s729 = sshll.u32 [#allocation2], 4
      %s730 = int_to_ptr.vmem [resolvable:$true] %s729
      %732 = dma.vmem_to_hbm [thread:$0]  %s730, 128, %s13, [#allocation3]
    $region57: #{mixed_variable_dae_forward.1} parent=1 // pred_fallthru
      _
    // Predicated region
    $region58: #{mixed_variable_dae_forward.1} parent=1 // pred_check
      _
    $region59: #{mixed_variable_dae_forward.1} parent=1 // pred_check_branch
      %734 = sbr.rel (0) target = $region61
    $region60: #{mixed_variable_dae_forward.1} parent=1 // pred_region
      %735 = dma.done [#allocation3], 128
    $region61: #{mixed_variable_dae_forward.1} parent=1 // pred_fallthru
      _
    %736 = vsyncpa [#allocation3], 1

</llo_original>
